<compile_context>
chip_gen: v6e
topology: v6e:2x2x1
jax: 0.10.0
libtpu: 0.0.40
codegen_flags: <defaults>
</compile_context>

<pallas_src>
import jax
import jax.numpy as jnp
from jax.experimental import pallas as pl
from jax.experimental.pallas import tpu as pltpu

BOARD_SIZE = 15
POLICY_DIM = 225
NUM_HISTORY = 3
INPUT_DIM = BOARD_SIZE * BOARD_SIZE + 1 + 2 * NUM_HISTORY + 2  # 234
HIDDEN_DIM = 256

K_PAD = 256      # INPUT_DIM (234) padded to a multiple of 128 for the first matmul
HEAD_PAD = 256   # policy (225) + value (1) + 30 zero cols -> lane-dense head output
ONE_COL = INPUT_DIM  # constant-1 input column used to fold b1 into W1


def _round_up(x, m):
    return (x + m - 1) // m * m


def _gomoku_kernel(x_ref, w1_ref, w2_ref, b2_ref, wh_ref, bh_ref, out_ref):
    # Whole network fused on the current batch tile.  All matmuls hit the MXU
    # with f32 accumulation; bias/ReLU run on the VPU in f32; tanh rides the
    # EUP slot.  Weights/biases are grid-resident (constant index_map).
    mm_dtype = w1_ref.dtype

    # fc1 (+ bias, folded into W1 via the constant-1 input column) + ReLU.
    h1 = jnp.dot(x_ref[...], w1_ref[...], preferred_element_type=jnp.float32)
    h1 = jnp.maximum(h1, 0.0).astype(mm_dtype)

    # fc2 + bias + ReLU.
    h2 = jnp.dot(h1, w2_ref[...], preferred_element_type=jnp.float32) + b2_ref[...]
    h2 = jnp.maximum(h2, 0.0).astype(mm_dtype)

    # Fused heads: one [tb, 256] lane-dense result; column 225 is the value head.
    heads = jnp.dot(h2, wh_ref[...], preferred_element_type=jnp.float32) + bh_ref[...]
    col = jax.lax.broadcasted_iota(jnp.int32, heads.shape, 1)
    out_ref[...] = jnp.where(col == POLICY_DIM, jnp.tanh(heads), heads)


def prepare_params(params, matmul_dtype=jnp.bfloat16):
    """Pad/pack raw (torch-transposed) params into the kernel layout.

    Returns (W1 [256,256] with b1 folded into row 234, W2 [256,256],
             b2 [1,256] f32, W_heads [256,256], b_heads [1,256] f32);
             weights in matmul_dtype.
    """
    w1, b1, w2, b2, wp, bp, wv, bv = params

    w1p = jnp.zeros((K_PAD, HIDDEN_DIM), jnp.float32)
    w1p = w1p.at[:INPUT_DIM, :].set(w1).at[ONE_COL, :].set(b1[0])

    wh = jnp.zeros((HIDDEN_DIM, HEAD_PAD), jnp.float32)
    wh = wh.at[:, :POLICY_DIM].set(wp).at[:, POLICY_DIM:POLICY_DIM + 1].set(wv)
    bh = jnp.zeros((1, HEAD_PAD), jnp.float32)
    bh = bh.at[:, :POLICY_DIM].set(bp).at[:, POLICY_DIM:POLICY_DIM + 1].set(bv)

    return (w1p.astype(matmul_dtype),
            w2.astype(matmul_dtype), b2,
            wh.astype(matmul_dtype), bh)


def gomoku_forward(x, params, *, tb=256, matmul_dtype=jnp.bfloat16):
    """x: [B, INPUT_DIM] float32. Returns (policy_logits [B,225], value [B,1])."""
    w1p, w2c, b2, wh, bh = prepare_params(params, matmul_dtype)

    B = x.shape[0]
    # Clamp the batch tile for tiny batches (keeps the 8-row sublane rule).
    tb = max(8, min(tb, _round_up(B, 8)))
    Bp = _round_up(B, tb)

    # Zero-pad batch to a tile multiple and features 234 -> 256; column 234 is
    # the constant-1 column that activates the folded fc1 bias (exact: the
    # remaining padded K columns multiply zero rows of W1).
    xp = jnp.zeros((Bp, K_PAD), matmul_dtype)
    xp = xp.at[:B, :INPUT_DIM].set(x.astype(matmul_dtype))
    xp = xp.at[:B, ONE_COL].set(jnp.asarray(1.0, matmul_dtype))

    rep = lambda i: (0, 0)  # weights/biases resident across all batch tiles

    out = pl.pallas_call(
        _gomoku_kernel,
        out_shape=jax.ShapeDtypeStruct((Bp, HEAD_PAD), jnp.float32),
        grid_spec=pltpu.PrefetchScalarGridSpec(
            num_scalar_prefetch=0,
            grid=(Bp // tb,),
            in_specs=[
                pl.BlockSpec((tb, K_PAD), lambda i: (i, 0)),        # x tile
                pl.BlockSpec((K_PAD, HIDDEN_DIM), rep),             # W1 (padded, b1 folded)
                pl.BlockSpec((HIDDEN_DIM, HIDDEN_DIM), rep),        # W2
                pl.BlockSpec((1, HIDDEN_DIM), rep),                 # b2
                pl.BlockSpec((HIDDEN_DIM, HEAD_PAD), rep),          # W_heads
                pl.BlockSpec((1, HEAD_PAD), rep),                   # b_heads
            ],
            out_specs=pl.BlockSpec((tb, HEAD_PAD), lambda i: (i, 0)),
        ),
        compiler_params=pltpu.CompilerParams(
            dimension_semantics=("parallel",),   # batch axis shards across TCs
            vmem_limit_bytes=32 * 1024 * 1024,   # headroom for large tb sweeps
        ),
    )(xp, w1p, w2c, b2, wh, bh)

    policy = out[:B, :POLICY_DIM]
    value = out[:B, POLICY_DIM:POLICY_DIM + 1]
    return policy, value


def init_params(key):
    """Deterministic init mimicking nn.Linear's U(-1/sqrt(fan_in), 1/sqrt(fan_in)).

    Weights are stored as (in_features, out_features) = torch weight transposed.
    """
    def linear(k, fan_in, fan_out):
        kw, kb = jax.random.split(k)
        bound = 1.0 / jnp.sqrt(fan_in)
        w = jax.random.uniform(kw, (fan_in, fan_out), jnp.float32, -bound, bound)
        b = jax.random.uniform(kb, (1, fan_out), jnp.float32, -bound, bound)
        return w, b

    k1, k2, k3, k4 = jax.random.split(key, 4)
    w1, b1 = linear(k1, INPUT_DIM, HIDDEN_DIM)
    w2, b2 = linear(k2, HIDDEN_DIM, HIDDEN_DIM)
    wp, bp = linear(k3, HIDDEN_DIM, POLICY_DIM)
    wv, bv = linear(k4, HIDDEN_DIM, 1)
    return (w1, b1, w2, b2, wp, bp, wv, bv)


def reference_forward(x, params):
    w1, b1, w2, b2, wp, bp, wv, bv = params
    h = jnp.maximum(x @ w1 + b1, 0.0)
    h = jnp.maximum(h @ w2 + b2, 0.0)
    return h @ wp + bp, jnp.tanh(h @ wv + bv)


if __name__ == "__main__":
    key = jax.random.PRNGKey(0)
    kx, kp, kx2 = jax.random.split(key, 3)

    B = 2
    x = jax.random.normal(kx, (B, INPUT_DIM), jnp.float32)
    params = init_params(kp)

    ref_policy, ref_value = reference_forward(x, params)

    # Exact-semantics path (f32 matmuls) — tight tolerance.
    policy32, value32 = gomoku_forward(x, params, matmul_dtype=jnp.float32)
    jax.block_until_ready((policy32, value32))
    assert policy32.shape == (B, POLICY_DIM) and value32.shape == (B, 1)
    assert jnp.allclose(policy32, ref_policy, atol=1e-4, rtol=1e-4)
    assert jnp.allclose(value32, ref_value, atol=1e-4, rtol=1e-4)

    # Default fast path (bf16 matmul inputs, f32 accumulation) — loose tolerance.
    policy, value = gomoku_forward(x, params)
    jax.block_until_ready((policy, value))
    assert policy.shape == (B, POLICY_DIM) and value.shape == (B, 1)
    assert jnp.allclose(policy, ref_policy, atol=5e-2, rtol=5e-2)
    assert jnp.allclose(value, ref_value, atol=5e-2, rtol=5e-2)

    # Multi-tile grid path (batch not a multiple of the tile, grid > 1).
    B2 = 48
    x2 = jax.random.normal(kx2, (B2, INPUT_DIM), jnp.float32)
    ref_p2, ref_v2 = reference_forward(x2, params)
    p2, v2 = gomoku_forward(x2, params, tb=16)
    jax.block_until_ready((p2, v2))
    assert p2.shape == (B2, POLICY_DIM) and v2.shape == (B2, 1)
    assert jnp.allclose(p2, ref_p2, atol=5e-2, rtol=5e-2)
    assert jnp.allclose(v2, ref_v2, atol=5e-2, rtol=5e-2)

    print("KERNEL_OK")
</pallas_src>

<mosaic_0001>
module attributes {stable_mosaic.version = 11 : i64} {
  func.func @_gomoku_kernel(%arg0: i32, %arg1: memref<8x256xf32, #tpu.memory_space<vmem>>, %arg2: memref<256x256xf32, #tpu.memory_space<vmem>>, %arg3: memref<256x256xf32, #tpu.memory_space<vmem>>, %arg4: memref<1x256xf32, #tpu.memory_space<vmem>>, %arg5: memref<256x256xf32, #tpu.memory_space<vmem>>, %arg6: memref<1x256xf32, #tpu.memory_space<vmem>>, %arg7: memref<8x256xf32, #tpu.memory_space<vmem>>) attributes {dimension_semantics = [#tpu.dimension_semantics<parallel>], iteration_bounds = array<i64: 1>, scalar_prefetch = 0 : i64, scratch_operands = 0 : i64, tpu.core_type = #tpu.core_type<tc>, window_params = [{transform_indices = @transform_0, window_bounds = array<i64: 8, 256>}, {pipeline_mode = #tpu.pipeline_mode<synchronous>, transform_indices = @transform_1, window_bounds = array<i64: 256, 256>}, {pipeline_mode = #tpu.pipeline_mode<synchronous>, transform_indices = @transform_2, window_bounds = array<i64: 256, 256>}, {pipeline_mode = #tpu.pipeline_mode<synchronous>, transform_indices = @transform_3, window_bounds = array<i64: 1, 256>}, {pipeline_mode = #tpu.pipeline_mode<synchronous>, transform_indices = @transform_4, window_bounds = array<i64: 256, 256>}, {pipeline_mode = #tpu.pipeline_mode<synchronous>, transform_indices = @transform_5, window_bounds = array<i64: 1, 256>}, {transform_indices = @transform_6, window_bounds = array<i64: 8, 256>}]} {
    %c0 = arith.constant 0 : index
    %c0_0 = arith.constant 0 : index
    %0 = vector.load %arg1[%c0, %c0_0] : memref<8x256xf32, #tpu.memory_space<vmem>>, vector<8x256xf32>
    %c0_1 = arith.constant 0 : index
    %c0_2 = arith.constant 0 : index
    %1 = vector.load %arg2[%c0_1, %c0_2] : memref<256x256xf32, #tpu.memory_space<vmem>>, vector<256x256xf32>
    %cst = arith.constant dense<0.000000e+00> : vector<8x256xf32>
    %2 = tpu.matmul %0, %1, %cst {dimension_numbers = #tpu.dot_dimension_numbers<[1], [0], [0], [1], [0, 0, 1, 1], [], []>} : vector<8x256xf32>, vector<256x256xf32>, vector<8x256xf32> -> vector<8x256xf32>
    %cst_3 = arith.constant 0.000000e+00 : f32
    %3 = vector.broadcast %cst_3 : f32 to vector<8x256xf32>
    %4 = arith.maximumf %2, %3 : vector<8x256xf32>
    %c0_4 = arith.constant 0 : index
    %c0_5 = arith.constant 0 : index
    %5 = vector.load %arg3[%c0_4, %c0_5] : memref<256x256xf32, #tpu.memory_space<vmem>>, vector<256x256xf32>
    %cst_6 = arith.constant dense<0.000000e+00> : vector<8x256xf32>
    %6 = tpu.matmul %4, %5, %cst_6 {dimension_numbers = #tpu.dot_dimension_numbers<[1], [0], [0], [1], [0, 0, 1, 1], [], []>} : vector<8x256xf32>, vector<256x256xf32>, vector<8x256xf32> -> vector<8x256xf32>
    %c0_7 = arith.constant 0 : index
    %c0_8 = arith.constant 0 : index
    %7 = vector.load %arg4[%c0_7, %c0_8] : memref<1x256xf32, #tpu.memory_space<vmem>>, vector<1x256xf32>
    %8 = vector.broadcast %7 : vector<1x256xf32> to vector<8x256xf32>
    %9 = arith.addf %6, %8 : vector<8x256xf32>
    %cst_9 = arith.constant 0.000000e+00 : f32
    %10 = vector.broadcast %cst_9 : f32 to vector<8x256xf32>
    %11 = arith.maximumf %9, %10 : vector<8x256xf32>
    %c0_10 = arith.constant 0 : index
    %c0_11 = arith.constant 0 : index
    %12 = vector.load %arg5[%c0_10, %c0_11] : memref<256x256xf32, #tpu.memory_space<vmem>>, vector<256x256xf32>
    %cst_12 = arith.constant dense<0.000000e+00> : vector<8x256xf32>
    %13 = tpu.matmul %11, %12, %cst_12 {dimension_numbers = #tpu.dot_dimension_numbers<[1], [0], [0], [1], [0, 0, 1, 1], [], []>} : vector<8x256xf32>, vector<256x256xf32>, vector<8x256xf32> -> vector<8x256xf32>
    %c0_13 = arith.constant 0 : index
    %c0_14 = arith.constant 0 : index
    %14 = vector.load %arg6[%c0_13, %c0_14] : memref<1x256xf32, #tpu.memory_space<vmem>>, vector<1x256xf32>
    %15 = vector.broadcast %14 : vector<1x256xf32> to vector<8x256xf32>
    %16 = arith.addf %13, %15 : vector<8x256xf32>
    %17 = tpu.iota {dimensions = array<i32: 1>} : vector<8x256xi32>
    %c225_i32 = arith.constant 225 : i32
    %18 = vector.broadcast %c225_i32 : i32 to vector<8x256xi32>
    %19 = arith.cmpi eq, %17, %18 : vector<8x256xi32>
    %20 = math.tanh %16 : vector<8x256xf32>
    %21 = arith.select %19, %20, %16 : vector<8x256xi1>, vector<8x256xf32>
    %c0_15 = arith.constant 0 : index
    %c0_16 = arith.constant 0 : index
    %22 = vector.load %arg7[%c0_15, %c0_16] : memref<8x256xf32, #tpu.memory_space<vmem>>, vector<8x256xf32>
    tpu.vector_store %arg7[%c0_15, %c0_16], %21 {strides = array<i32>} : memref<8x256xf32, #tpu.memory_space<vmem>>, vector<8x256xf32>,
    return
  }
  func.func @transform_0(%arg0: i32) -> (i32, i32) {
    %c0_i32 = arith.constant 0 : i32
    %c0_i32_0 = arith.constant 0 : i32
    return %arg0, %c0_i32 : i32, i32
  }
  func.func @transform_1(%arg0: i32) -> (i32, i32) {
    %c0_i32 = arith.constant 0 : i32
    %c0_i32_0 = arith.constant 0 : i32
    %c0_i32_1 = arith.constant 0 : i32
    return %c0_i32, %c0_i32_0 : i32, i32
  }
  func.func @transform_2(%arg0: i32) -> (i32, i32) {
    %c0_i32 = arith.constant 0 : i32
    %c0_i32_0 = arith.constant 0 : i32
    %c0_i32_1 = arith.constant 0 : i32
    return %c0_i32, %c0_i32_0 : i32, i32
  }
  func.func @transform_3(%arg0: i32) -> (i32, i32) {
    %c0_i32 = arith.constant 0 : i32
    %c0_i32_0 = arith.constant 0 : i32
    %c0_i32_1 = arith.constant 0 : i32
    return %c0_i32, %c0_i32_0 : i32, i32
  }
  func.func @transform_4(%arg0: i32) -> (i32, i32) {
    %c0_i32 = arith.constant 0 : i32
    %c0_i32_0 = arith.constant 0 : i32
    %c0_i32_1 = arith.constant 0 : i32
    return %c0_i32, %c0_i32_0 : i32, i32
  }
  func.func @transform_5(%arg0: i32) -> (i32, i32) {
    %c0_i32 = arith.constant 0 : i32
    %c0_i32_0 = arith.constant 0 : i32
    %c0_i32_1 = arith.constant 0 : i32
    return %c0_i32, %c0_i32_0 : i32, i32
  }
  func.func @transform_6(%arg0: i32) -> (i32, i32) {
    %c0_i32 = arith.constant 0 : i32
    %c0_i32_0 = arith.constant 0 : i32
    return %arg0, %c0_i32 : i32, i32
  }
}

</mosaic_0001>

<llo_original>
// kernel: tpu_custom_call.1
$region0: #{tpu_custom_call.1}
  #allocation0 [shape = 'u32[]', space=smem, size = 0x4, offset = 0x4, fixed_abs, tag = 'smem constant byte address 0x4 - core index']
  #allocation1 [shape = 'u32[144,128]{1,0:T(1,128)}', space=vmem, size = 0x12000, scoped, tag = 'internal scratch']
  %s0 = inlined_call_operand.hbm [shape: f32[8,256], index: 0, kind: input, shape index: {}]
  %s1 = inlined_call_operand.hbm [shape: f32[256,256], index: 1, kind: input, shape index: {}]
  %s2 = inlined_call_operand.hbm [shape: f32[256,256], index: 2, kind: input, shape index: {}]
  %s3 = inlined_call_operand.vmem [shape: f32[1,256], index: 3, kind: input, shape index: {}]
  %s4 = inlined_call_operand.hbm [shape: f32[256,256], index: 4, kind: input, shape index: {}]
  %s5 = inlined_call_operand.vmem [shape: f32[1,256], index: 5, kind: input, shape index: {}]
  %s6 = inlined_call_operand.hbm [shape: f32[8,256], index: 6, kind: output, shape index: {}]
  %s7 = sld [smem:[#allocation0]]
  $region50: #{tpu_custom_call.1} parent=0
    _
  %s9 = ssub.s32 1, %s7
  %s10 = scalar_select 0, %s9, %s7
  $region1: #{tpu_custom_call.1} parent=0
    #allocation2 [shape = 'u8[8192]{0}', space=vmem, size = 0x2000, scoped, tag = 'input window, operand 0, single buffered']
    #allocation3 [shape = 's32[1]{0}', space=sflag, size = 0x4, scoped, tag = 'scoped memory for tpu_custom_call.1']
    #allocation4 [shape = 's32[1]{0}', space=sflag, size = 0x4, scoped, tag = 'scoped memory for tpu_custom_call.1']
    #allocation5 [shape = 'u8[262144]{0}', space=vmem, size = 0x40000, scoped, tag = 'input window, operand 1, single buffered']
    #allocation6 [shape = 's32[1]{0}', space=sflag, size = 0x4, scoped, tag = 'scoped memory for tpu_custom_call.1']
    #allocation7 [shape = 'u8[262144]{0}', space=vmem, size = 0x40000, scoped, tag = 'input window, operand 2, single buffered']
    #allocation8 [shape = 'u8[262144]{0}', space=vmem, size = 0x40000, scoped, tag = 'input window, operand 4, single buffered']
    #allocation9 [shape = 's32[1]{0}', space=sflag, size = 0x4, scoped, tag = 'scoped memory for tpu_custom_call.1']
    #allocation10 [shape = 'u8[8192]{0}', space=vmem, size = 0x2000, scoped, tag = 'output window, operand 0, single buffered']
    %11 = vsyncpa [#allocation3], 0
    %12 = vsyncpa [#allocation6], 0
    %13 = vsyncpa [#allocation9], 0
    %14 = vsyncpa [#allocation4], 0
    // Predicated region
    $region2: #{tpu_custom_call.1} parent=1 // pred_check
      _
    $region3: #{tpu_custom_call.1} parent=1 // pred_check_branch
      %16 = sbr.rel (0) target = $region5
    $region4: #{tpu_custom_call.1} parent=1 // pred_region
      %s18 = ssub.s32 256, 256
      %19 = vsyncadd [#allocation3], %s18
      %s21 = sshll.u32 [#allocation2], 4
      %s22 = int_to_ptr.vmem [resolvable:$true] %s21
      %24 = dma.hbm_to_vmem [thread:$0]  %s0, 256, %s22, [#allocation3]
    $region5: #{tpu_custom_call.1} parent=1 // pred_fallthru
      _
    // Predicated region
    $region6: #{tpu_custom_call.1} parent=1 // pred_check
      _
    $region7: #{tpu_custom_call.1} parent=1 // pred_check_branch
      %26 = sbr.rel (0) target = $region9
    $region8: #{tpu_custom_call.1} parent=1 // pred_region
      %s28 = ssub.s32 8192, 8192
      %29 = vsyncadd [#allocation6], %s28
      %s30 = sshll.u32 [#allocation5], 4
      %s31 = int_to_ptr.vmem [resolvable:$true] %s30
      %36 = dma.hbm_to_vmem [thread:$0]  %s1, 8192, %s31, [#allocation6], 256, 256, 16
    $region9: #{tpu_custom_call.1} parent=1 // pred_fallthru
      _
    // Predicated region
    $region10: #{tpu_custom_call.1} parent=1 // pred_check
      _
    $region11: #{tpu_custom_call.1} parent=1 // pred_check_branch
      %38 = sbr.rel (0) target = $region13
    $region12: #{tpu_custom_call.1} parent=1 // pred_region
      %s40 = ssub.s32 8192, 8192
      %41 = vsyncadd [#allocation6], %s40
      %s42 = sshll.u32 [#allocation7], 4
      %s43 = int_to_ptr.vmem [resolvable:$true] %s42
      %48 = dma.hbm_to_vmem [thread:$0]  %s2, 8192, %s43, [#allocation6], 256, 256, 16
    $region13: #{tpu_custom_call.1} parent=1 // pred_fallthru
      _
    // Predicated region
    $region14: #{tpu_custom_call.1} parent=1 // pred_check
      _
    $region15: #{tpu_custom_call.1} parent=1 // pred_check_branch
      %50 = sbr.rel (0) target = $region17
    $region16: #{tpu_custom_call.1} parent=1 // pred_region
      _
    $region17: #{tpu_custom_call.1} parent=1 // pred_fallthru
      _
    // Predicated region
    $region18: #{tpu_custom_call.1} parent=1 // pred_check
      _
    $region19: #{tpu_custom_call.1} parent=1 // pred_check_branch
      %52 = sbr.rel (0) target = $region21
    $region20: #{tpu_custom_call.1} parent=1 // pred_region
      %s54 = ssub.s32 8192, 8192
      %55 = vsyncadd [#allocation9], %s54
      %s56 = sshll.u32 [#allocation8], 4
      %s57 = int_to_ptr.vmem [resolvable:$true] %s56
      %62 = dma.hbm_to_vmem [thread:$0]  %s4, 8192, %s57, [#allocation9], 256, 256, 16
    $region21: #{tpu_custom_call.1} parent=1 // pred_fallthru
      _
    // Predicated region
    $region22: #{tpu_custom_call.1} parent=1 // pred_check
      _
    $region23: #{tpu_custom_call.1} parent=1 // pred_check_branch
      %64 = sbr.rel (0) target = $region25
    $region24: #{tpu_custom_call.1} parent=1 // pred_region
      _
    $region25: #{tpu_custom_call.1} parent=1 // pred_fallthru
      _
    // Predicated region
    $region26: #{tpu_custom_call.1} parent=1 // pred_check
      _
    $region27: #{tpu_custom_call.1} parent=1 // pred_check_branch
      %66 = sbr.rel (0) target = $region29
    $region28: #{tpu_custom_call.1} parent=1 // pred_region
      %67 = dma.done [#allocation3], 256
    $region29: #{tpu_custom_call.1} parent=1 // pred_fallthru
      _
    // Predicated region
    $region30: #{tpu_custom_call.1} parent=1 // pred_check
      _
    $region31: #{tpu_custom_call.1} parent=1 // pred_check_branch
      %69 = sbr.rel (0) target = $region33
    $region32: #{tpu_custom_call.1} parent=1 // pred_region
      %70 = dma.done [#allocation6], 8192
    $region33: #{tpu_custom_call.1} parent=1 // pred_fallthru
      _
    // Predicated region
    $region34: #{tpu_custom_call.1} parent=1 // pred_check
      _
    $region35: #{tpu_custom_call.1} parent=1 // pred_check_branch
      %72 = sbr.rel (0) target = $region37
    $region36: #{tpu_custom_call.1} parent=1 // pred_region
      %73 = dma.done [#allocation6], 8192
    $region37: #{tpu_custom_call.1} parent=1 // pred_fallthru
      _
    // Predicated region
    $region38: #{tpu_custom_call.1} parent=1 // pred_check
      _
    $region39: #{tpu_custom_call.1} parent=1 // pred_check_branch
      %75 = sbr.rel (0) target = $region41
    $region40: #{tpu_custom_call.1} parent=1 // pred_region
      %76 = dma.done [#allocation9], 8192
    $region41: #{tpu_custom_call.1} parent=1 // pred_fallthru
      _
    %v77 = vld [vmem:[#allocation2] sm:$0xff]
    %v78 = vld [vmem:[#allocation2 + $0x8] sm:$0xff]
    %v79 = vld [vmem:[#allocation5] sm:$0xff]
    %v80 = vld [vmem:[#allocation5 + $0x8] sm:$0xff]
    %v81 = vld [vmem:[#allocation5 + $0x10] sm:$0xff]
    %v82 = vld [vmem:[#allocation5 + $0x18] sm:$0xff]
    %v83 = vld [vmem:[#allocation5 + $0x20] sm:$0xff]
    %v84 = vld [vmem:[#allocation5 + $0x28] sm:$0xff]
    %v85 = vld [vmem:[#allocation5 + $0x30] sm:$0xff]
    %v86 = vld [vmem:[#allocation5 + $0x38] sm:$0xff]
    %v87 = vld [vmem:[#allocation5 + $0x40] sm:$0xff]
    %v88 = vld [vmem:[#allocation5 + $0x48] sm:$0xff]
    %v89 = vld [vmem:[#allocation5 + $0x50] sm:$0xff]
    %v90 = vld [vmem:[#allocation5 + $0x58] sm:$0xff]
    %v91 = vld [vmem:[#allocation5 + $0x60] sm:$0xff]
    %v92 = vld [vmem:[#allocation5 + $0x68] sm:$0xff]
    %v93 = vld [vmem:[#allocation5 + $0x70] sm:$0xff]
    %v94 = vld [vmem:[#allocation5 + $0x78] sm:$0xff]
    %v95 = vld [vmem:[#allocation5 + $0x80] sm:$0xff]
    %v96 = vld [vmem:[#allocation5 + $0x88] sm:$0xff]
    %v97 = vld [vmem:[#allocation5 + $0x90] sm:$0xff]
    %v98 = vld [vmem:[#allocation5 + $0x98] sm:$0xff]
    %v99 = vld [vmem:[#allocation5 + $0xa0] sm:$0xff]
    %v100 = vld [vmem:[#allocation5 + $0xa8] sm:$0xff]
    %v101 = vld [vmem:[#allocation5 + $0xb0] sm:$0xff]
    %v102 = vld [vmem:[#allocation5 + $0xb8] sm:$0xff]
    %v103 = vld [vmem:[#allocation5 + $0xc0] sm:$0xff]
    %v104 = vld [vmem:[#allocation5 + $0xc8] sm:$0xff]
    %v105 = vld [vmem:[#allocation5 + $0xd0] sm:$0xff]
    %v106 = vld [vmem:[#allocation5 + $0xd8] sm:$0xff]
    %v107 = vld [vmem:[#allocation5 + $0xe0] sm:$0xff]
    %v108 = vld [vmem:[#allocation5 + $0xe8] sm:$0xff]
    %v109 = vld [vmem:[#allocation5 + $0xf0] sm:$0xff]
    %v110 = vld [vmem:[#allocation5 + $0xf8] sm:$0xff]
    %v111 = vld [vmem:[#allocation5 + $0x100] sm:$0xff]
    %v112 = vld [vmem:[#allocation5 + $0x108] sm:$0xff]
    %v113 = vld [vmem:[#allocation5 + $0x110] sm:$0xff]
    %v114 = vld [vmem:[#allocation5 + $0x118] sm:$0xff]
    %v115 = vld [vmem:[#allocation5 + $0x120] sm:$0xff]
    %v116 = vld [vmem:[#allocation5 + $0x128] sm:$0xff]
    %v117 = vld [vmem:[#allocation5 + $0x130] sm:$0xff]
    %v118 = vld [vmem:[#allocation5 + $0x138] sm:$0xff]
    %v119 = vld [vmem:[#allocation5 + $0x140] sm:$0xff]
    %v120 = vld [vmem:[#allocation5 + $0x148] sm:$0xff]
    %v121 = vld [vmem:[#allocation5 + $0x150] sm:$0xff]
    %v122 = vld [vmem:[#allocation5 + $0x158] sm:$0xff]
    %v123 = vld [vmem:[#allocation5 + $0x160] sm:$0xff]
    %v124 = vld [vmem:[#allocation5 + $0x168] sm:$0xff]
    %v125 = vld [vmem:[#allocation5 + $0x170] sm:$0xff]
    %v126 = vld [vmem:[#allocation5 + $0x178] sm:$0xff]
    %v127 = vld [vmem:[#allocation5 + $0x180] sm:$0xff]
    %v128 = vld [vmem:[#allocation5 + $0x188] sm:$0xff]
    %v129 = vld [vmem:[#allocation5 + $0x190] sm:$0xff]
    %v130 = vld [vmem:[#allocation5 + $0x198] sm:$0xff]
    %v131 = vld [vmem:[#allocation5 + $0x1a0] sm:$0xff]
    %v132 = vld [vmem:[#allocation5 + $0x1a8] sm:$0xff]
    %v133 = vld [vmem:[#allocation5 + $0x1b0] sm:$0xff]
    %v134 = vld [vmem:[#allocation5 + $0x1b8] sm:$0xff]
    %v135 = vld [vmem:[#allocation5 + $0x1c0] sm:$0xff]
    %v136 = vld [vmem:[#allocation5 + $0x1c8] sm:$0xff]
    %v137 = vld [vmem:[#allocation5 + $0x1d0] sm:$0xff]
    %v138 = vld [vmem:[#allocation5 + $0x1d8] sm:$0xff]
    %v139 = vld [vmem:[#allocation5 + $0x1e0] sm:$0xff]
    %v140 = vld [vmem:[#allocation5 + $0x1e8] sm:$0xff]
    %v141 = vld [vmem:[#allocation5 + $0x1f0] sm:$0xff]
    %v142 = vld [vmem:[#allocation5 + $0x1f8] sm:$0xff]
    %143 = vmatprep.subr.mxu0 %v110
    %144 = vmatpush1.msra.mxu0 %v109
    %145 = vmatprep.subr.mxu0 %v108
    %146 = vmatpush1.msra.mxu0 %v107
    %147 = vmatprep.subr.mxu0 %v106
    %148 = vmatpush1.msra.mxu0 %v105
    %149 = vmatprep.subr.mxu0 %v104
    %150 = vmatpush1.msra.mxu0 %v103
    %151 = vmatprep.subr.mxu0 %v102
    %152 = vmatpush1.msra.mxu0 %v101
    %153 = vmatprep.subr.mxu0 %v100
    %154 = vmatpush1.msra.mxu0 %v99
    %155 = vmatprep.subr.mxu0 %v98
    %156 = vmatpush1.msra.mxu0 %v97
    %157 = vmatprep.subr.mxu0 %v96
    %158 = vmatpush1.msra.mxu0 %v95
    %159 = vmatprep.subr.mxu0 %v94
    %160 = vmatpush1.msra.mxu0 %v93
    %161 = vmatprep.subr.mxu0 %v92
    %162 = vmatpush1.msra.mxu0 %v91
    %163 = vmatprep.subr.mxu0 %v90
    %164 = vmatpush1.msra.mxu0 %v89
    %165 = vmatprep.subr.mxu0 %v88
    %166 = vmatpush1.msra.mxu0 %v87
    %167 = vmatprep.subr.mxu0 %v86
    %168 = vmatpush1.msra.mxu0 %v85
    %169 = vmatprep.subr.mxu0 %v84
    %170 = vmatpush1.msra.mxu0 %v83
    %171 = vmatprep.subr.mxu0 %v82
    %172 = vmatpush1.msra.mxu0 %v81
    %173 = vmatprep.subr.mxu0 %v80
    %174 = vmatpush1.msra.mxu0 %v79
    %175 = vmatprep.subr.mxu0 %v142
    %176 = vmatpush2.msra.mxu0 %v141
    %177 = vmatprep.subr.mxu0 %v140
    %178 = vmatpush2.msra.mxu0 %v139
    %179 = vmatprep.subr.mxu0 %v138
    %180 = vmatpush2.msra.mxu0 %v137
    %181 = vmatprep.subr.mxu0 %v136
    %182 = vmatpush2.msra.mxu0 %v135
    %183 = vmatprep.subr.mxu0 %v134
    %184 = vmatpush2.msra.mxu0 %v133
    %185 = vmatprep.subr.mxu0 %v132
    %186 = vmatpush2.msra.mxu0 %v131
    %187 = vmatprep.subr.mxu0 %v130
    %188 = vmatpush2.msra.mxu0 %v129
    %189 = vmatprep.subr.mxu0 %v128
    %190 = vmatpush2.msra.mxu0 %v127
    %191 = vmatprep.subr.mxu0 %v126
    %192 = vmatpush2.msra.mxu0 %v125
    %193 = vmatprep.subr.mxu0 %v124
    %194 = vmatpush2.msra.mxu0 %v123
    %195 = vmatprep.subr.mxu0 %v122
    %196 = vmatpush2.msra.mxu0 %v121
    %197 = vmatprep.subr.mxu0 %v120
    %198 = vmatpush2.msra.mxu0 %v119
    %199 = vmatprep.subr.mxu0 %v118
    %200 = vmatpush2.msra.mxu0 %v117
    %201 = vmatprep.subr.mxu0 %v116
    %202 = vmatpush2.msra.mxu0 %v115
    %203 = vmatprep.subr.mxu0 %v114
    %204 = vmatpush2.msra.mxu0 %v113
    %205 = vmatprep.subr.mxu0 %v112
    %206 = vmatpush2.msra.mxu0 %v111
    %207 = vmatprep.mubr.f32.mxu0 %v78
    %208 = vmatmul.mubr.f32.gmra.mxu0 %v77
    %v209 = vpop.f32.mrf.mxu0
    %v210 = vadd.f32 0.0, %v209
    %v211 = vpop.f32.mrf.mxu0
    %v212 = vadd.f32 0.0, %v211
    %213 = vdwg.mxu0
    %v214 = vmax.f32 %v210, 0.0
    %v215 = vmax.f32 %v212, 0.0
    %v216 = vld [vmem:[#allocation7] sm:$0xff]
    %v217 = vld [vmem:[#allocation7 + $0x8] sm:$0xff]
    %v218 = vld [vmem:[#allocation7 + $0x10] sm:$0xff]
    %v219 = vld [vmem:[#allocation7 + $0x18] sm:$0xff]
    %v220 = vld [vmem:[#allocation7 + $0x20] sm:$0xff]
    %v221 = vld [vmem:[#allocation7 + $0x28] sm:$0xff]
    %v222 = vld [vmem:[#allocation7 + $0x30] sm:$0xff]
    %v223 = vld [vmem:[#allocation7 + $0x38] sm:$0xff]
    %v224 = vld [vmem:[#allocation7 + $0x40] sm:$0xff]
    %v225 = vld [vmem:[#allocation7 + $0x48] sm:$0xff]
    %v226 = vld [vmem:[#allocation7 + $0x50] sm:$0xff]
    %v227 = vld [vmem:[#allocation7 + $0x58] sm:$0xff]
    %v228 = vld [vmem:[#allocation7 + $0x60] sm:$0xff]
    %v229 = vld [vmem:[#allocation7 + $0x68] sm:$0xff]
    %v230 = vld [vmem:[#allocation7 + $0x70] sm:$0xff]
    %v231 = vld [vmem:[#allocation7 + $0x78] sm:$0xff]
    %v232 = vld [vmem:[#allocation7 + $0x80] sm:$0xff]
    %v233 = vld [vmem:[#allocation7 + $0x88] sm:$0xff]
    %v234 = vld [vmem:[#allocation7 + $0x90] sm:$0xff]
    %v235 = vld [vmem:[#allocation7 + $0x98] sm:$0xff]
    %v236 = vld [vmem:[#allocation7 + $0xa0] sm:$0xff]
    %v237 = vld [vmem:[#allocation7 + $0xa8] sm:$0xff]
    %v238 = vld [vmem:[#allocation7 + $0xb0] sm:$0xff]
    %v239 = vld [vmem:[#allocation7 + $0xb8] sm:$0xff]
    %v240 = vld [vmem:[#allocation7 + $0xc0] sm:$0xff]
    %v241 = vld [vmem:[#allocation7 + $0xc8] sm:$0xff]
    %v242 = vld [vmem:[#allocation7 + $0xd0] sm:$0xff]
    %v243 = vld [vmem:[#allocation7 + $0xd8] sm:$0xff]
    %v244 = vld [vmem:[#allocation7 + $0xe0] sm:$0xff]
    %v245 = vld [vmem:[#allocation7 + $0xe8] sm:$0xff]
    %v246 = vld [vmem:[#allocation7 + $0xf0] sm:$0xff]
    %v247 = vld [vmem:[#allocation7 + $0xf8] sm:$0xff]
    %v248 = vld [vmem:[#allocation7 + $0x100] sm:$0xff]
    %v249 = vld [vmem:[#allocation7 + $0x108] sm:$0xff]
    %v250 = vld [vmem:[#allocation7 + $0x110] sm:$0xff]
    %v251 = vld [vmem:[#allocation7 + $0x118] sm:$0xff]
    %v252 = vld [vmem:[#allocation7 + $0x120] sm:$0xff]
    %v253 = vld [vmem:[#allocation7 + $0x128] sm:$0xff]
    %v254 = vld [vmem:[#allocation7 + $0x130] sm:$0xff]
    %v255 = vld [vmem:[#allocation7 + $0x138] sm:$0xff]
    %v256 = vld [vmem:[#allocation7 + $0x140] sm:$0xff]
    %v257 = vld [vmem:[#allocation7 + $0x148] sm:$0xff]
    %v258 = vld [vmem:[#allocation7 + $0x150] sm:$0xff]
    %v259 = vld [vmem:[#allocation7 + $0x158] sm:$0xff]
    %v260 = vld [vmem:[#allocation7 + $0x160] sm:$0xff]
    %v261 = vld [vmem:[#allocation7 + $0x168] sm:$0xff]
    %v262 = vld [vmem:[#allocation7 + $0x170] sm:$0xff]
    %v263 = vld [vmem:[#allocation7 + $0x178] sm:$0xff]
    %v264 = vld [vmem:[#allocation7 + $0x180] sm:$0xff]
    %v265 = vld [vmem:[#allocation7 + $0x188] sm:$0xff]
    %v266 = vld [vmem:[#allocation7 + $0x190] sm:$0xff]
    %v267 = vld [vmem:[#allocation7 + $0x198] sm:$0xff]
    %v268 = vld [vmem:[#allocation7 + $0x1a0] sm:$0xff]
    %v269 = vld [vmem:[#allocation7 + $0x1a8] sm:$0xff]
    %v270 = vld [vmem:[#allocation7 + $0x1b0] sm:$0xff]
    %v271 = vld [vmem:[#allocation7 + $0x1b8] sm:$0xff]
    %v272 = vld [vmem:[#allocation7 + $0x1c0] sm:$0xff]
    %v273 = vld [vmem:[#allocation7 + $0x1c8] sm:$0xff]
    %v274 = vld [vmem:[#allocation7 + $0x1d0] sm:$0xff]
    %v275 = vld [vmem:[#allocation7 + $0x1d8] sm:$0xff]
    %v276 = vld [vmem:[#allocation7 + $0x1e0] sm:$0xff]
    %v277 = vld [vmem:[#allocation7 + $0x1e8] sm:$0xff]
    %v278 = vld [vmem:[#allocation7 + $0x1f0] sm:$0xff]
    %v279 = vld [vmem:[#allocation7 + $0x1f8] sm:$0xff]
    %v280 = vld [vmem:[%s3] sm:$0x3]
    %v282 = vlaneseq
    %v283 = vshrl.u32 %v282, 7
    %v284 = vsub.s32 0, %v283
    %v285 = vrot.slane %v280, %v284
    %v286 = vlaneseq
    %v287 = vshrl.u32 %v286, 7
    %v288 = vsub.s32 1, %v287
    %v289 = vrot.slane %v280, %v288
    %292 = vmatprep.subr.mxu0 %v247
    %293 = vmatpush1.msra.mxu0 %v246
    %294 = vmatprep.subr.mxu0 %v245
    %295 = vmatpush1.msra.mxu0 %v244
    %296 = vmatprep.subr.mxu0 %v243
    %297 = vmatpush1.msra.mxu0 %v242
    %298 = vmatprep.subr.mxu0 %v241
    %299 = vmatpush1.msra.mxu0 %v240
    %300 = vmatprep.subr.mxu0 %v239
    %301 = vmatpush1.msra.mxu0 %v238
    %302 = vmatprep.subr.mxu0 %v237
    %303 = vmatpush1.msra.mxu0 %v236
    %304 = vmatprep.subr.mxu0 %v235
    %305 = vmatpush1.msra.mxu0 %v234
    %306 = vmatprep.subr.mxu0 %v233
    %307 = vmatpush1.msra.mxu0 %v232
    %308 = vmatprep.subr.mxu0 %v231
    %309 = vmatpush1.msra.mxu0 %v230
    %310 = vmatprep.subr.mxu0 %v229
    %311 = vmatpush1.msra.mxu0 %v228
    %312 = vmatprep.subr.mxu0 %v227
    %313 = vmatpush1.msra.mxu0 %v226
    %314 = vmatprep.subr.mxu0 %v225
    %315 = vmatpush1.msra.mxu0 %v224
    %316 = vmatprep.subr.mxu0 %v223
    %317 = vmatpush1.msra.mxu0 %v222
    %318 = vmatprep.subr.mxu0 %v221
    %319 = vmatpush1.msra.mxu0 %v220
    %320 = vmatprep.subr.mxu0 %v219
    %321 = vmatpush1.msra.mxu0 %v218
    %322 = vmatprep.subr.mxu0 %v217
    %323 = vmatpush1.msra.mxu0 %v216
    %324 = vmatprep.subr.mxu0 %v279
    %325 = vmatpush2.msra.mxu0 %v278
    %326 = vmatprep.subr.mxu0 %v277
    %327 = vmatpush2.msra.mxu0 %v276
    %328 = vmatprep.subr.mxu0 %v275
    %329 = vmatpush2.msra.mxu0 %v274
    %330 = vmatprep.subr.mxu0 %v273
    %331 = vmatpush2.msra.mxu0 %v272
    %332 = vmatprep.subr.mxu0 %v271
    %333 = vmatpush2.msra.mxu0 %v270
    %334 = vmatprep.subr.mxu0 %v269
    %335 = vmatpush2.msra.mxu0 %v268
    %336 = vmatprep.subr.mxu0 %v267
    %337 = vmatpush2.msra.mxu0 %v266
    %338 = vmatprep.subr.mxu0 %v265
    %339 = vmatpush2.msra.mxu0 %v264
    %340 = vmatprep.subr.mxu0 %v263
    %341 = vmatpush2.msra.mxu0 %v262
    %342 = vmatprep.subr.mxu0 %v261
    %343 = vmatpush2.msra.mxu0 %v260
    %344 = vmatprep.subr.mxu0 %v259
    %345 = vmatpush2.msra.mxu0 %v258
    %346 = vmatprep.subr.mxu0 %v257
    %347 = vmatpush2.msra.mxu0 %v256
    %348 = vmatprep.subr.mxu0 %v255
    %349 = vmatpush2.msra.mxu0 %v254
    %350 = vmatprep.subr.mxu0 %v253
    %351 = vmatpush2.msra.mxu0 %v252
    %352 = vmatprep.subr.mxu0 %v251
    %353 = vmatpush2.msra.mxu0 %v250
    %354 = vmatprep.subr.mxu0 %v249
    %355 = vmatpush2.msra.mxu0 %v248
    %356 = vmatprep.mubr.f32.mxu0 %v215
    %357 = vmatmul.mubr.f32.gmra.mxu0 %v214
    %v358 = vpop.f32.mrf.mxu0
    %v359 = vadd.f32 %v285, %v358
    %v360 = vpop.f32.mrf.mxu0
    %v361 = vadd.f32 %v289, %v360
    %362 = vdwg.mxu0
    %v363 = vmax.f32 %v359, 0.0
    %v364 = vmax.f32 %v361, 0.0
    %v365 = vld [vmem:[#allocation8] sm:$0xff]
    %v366 = vld [vmem:[#allocation8 + $0x8] sm:$0xff]
    %v367 = vld [vmem:[#allocation8 + $0x10] sm:$0xff]
    %v368 = vld [vmem:[#allocation8 + $0x18] sm:$0xff]
    %v369 = vld [vmem:[#allocation8 + $0x20] sm:$0xff]
    %v370 = vld [vmem:[#allocation8 + $0x28] sm:$0xff]
    %v371 = vld [vmem:[#allocation8 + $0x30] sm:$0xff]
    %v372 = vld [vmem:[#allocation8 + $0x38] sm:$0xff]
    %v373 = vld [vmem:[#allocation8 + $0x40] sm:$0xff]
    %v374 = vld [vmem:[#allocation8 + $0x48] sm:$0xff]
    %v375 = vld [vmem:[#allocation8 + $0x50] sm:$0xff]
    %v376 = vld [vmem:[#allocation8 + $0x58] sm:$0xff]
    %v377 = vld [vmem:[#allocation8 + $0x60] sm:$0xff]
    %v378 = vld [vmem:[#allocation8 + $0x68] sm:$0xff]
    %v379 = vld [vmem:[#allocation8 + $0x70] sm:$0xff]
    %v380 = vld [vmem:[#allocation8 + $0x78] sm:$0xff]
    %v381 = vld [vmem:[#allocation8 + $0x80] sm:$0xff]
    %v382 = vld [vmem:[#allocation8 + $0x88] sm:$0xff]
    %v383 = vld [vmem:[#allocation8 + $0x90] sm:$0xff]
    %v384 = vld [vmem:[#allocation8 + $0x98] sm:$0xff]
    %v385 = vld [vmem:[#allocation8 + $0xa0] sm:$0xff]
    %v386 = vld [vmem:[#allocation8 + $0xa8] sm:$0xff]
    %v387 = vld [vmem:[#allocation8 + $0xb0] sm:$0xff]
    %v388 = vld [vmem:[#allocation8 + $0xb8] sm:$0xff]
    %v389 = vld [vmem:[#allocation8 + $0xc0] sm:$0xff]
    %v390 = vld [vmem:[#allocation8 + $0xc8] sm:$0xff]
    %v391 = vld [vmem:[#allocation8 + $0xd0] sm:$0xff]
    %v392 = vld [vmem:[#allocation8 + $0xd8] sm:$0xff]
    %v393 = vld [vmem:[#allocation8 + $0xe0] sm:$0xff]
    %v394 = vld [vmem:[#allocation8 + $0xe8] sm:$0xff]
    %v395 = vld [vmem:[#allocation8 + $0xf0] sm:$0xff]
    %v396 = vld [vmem:[#allocation8 + $0xf8] sm:$0xff]
    %v397 = vld [vmem:[#allocation8 + $0x100] sm:$0xff]
    %v398 = vld [vmem:[#allocation8 + $0x108] sm:$0xff]
    %v399 = vld [vmem:[#allocation8 + $0x110] sm:$0xff]
    %v400 = vld [vmem:[#allocation8 + $0x118] sm:$0xff]
    %v401 = vld [vmem:[#allocation8 + $0x120] sm:$0xff]
    %v402 = vld [vmem:[#allocation8 + $0x128] sm:$0xff]
    %v403 = vld [vmem:[#allocation8 + $0x130] sm:$0xff]
    %v404 = vld [vmem:[#allocation8 + $0x138] sm:$0xff]
    %v405 = vld [vmem:[#allocation8 + $0x140] sm:$0xff]
    %v406 = vld [vmem:[#allocation8 + $0x148] sm:$0xff]
    %v407 = vld [vmem:[#allocation8 + $0x150] sm:$0xff]
    %v408 = vld [vmem:[#allocation8 + $0x158] sm:$0xff]
    %v409 = vld [vmem:[#allocation8 + $0x160] sm:$0xff]
    %v410 = vld [vmem:[#allocation8 + $0x168] sm:$0xff]
    %v411 = vld [vmem:[#allocation8 + $0x170] sm:$0xff]
    %v412 = vld [vmem:[#allocation8 + $0x178] sm:$0xff]
    %v413 = vld [vmem:[#allocation8 + $0x180] sm:$0xff]
    %v414 = vld [vmem:[#allocation8 + $0x188] sm:$0xff]
    %v415 = vld [vmem:[#allocation8 + $0x190] sm:$0xff]
    %v416 = vld [vmem:[#allocation8 + $0x198] sm:$0xff]
    %v417 = vld [vmem:[#allocation8 + $0x1a0] sm:$0xff]
    %v418 = vld [vmem:[#allocation8 + $0x1a8] sm:$0xff]
    %v419 = vld [vmem:[#allocation8 + $0x1b0] sm:$0xff]
    %v420 = vld [vmem:[#allocation8 + $0x1b8] sm:$0xff]
    %v421 = vld [vmem:[#allocation8 + $0x1c0] sm:$0xff]
    %v422 = vld [vmem:[#allocation8 + $0x1c8] sm:$0xff]
    %v423 = vld [vmem:[#allocation8 + $0x1d0] sm:$0xff]
    %v424 = vld [vmem:[#allocation8 + $0x1d8] sm:$0xff]
    %v425 = vld [vmem:[#allocation8 + $0x1e0] sm:$0xff]
    %v426 = vld [vmem:[#allocation8 + $0x1e8] sm:$0xff]
    %v427 = vld [vmem:[#allocation8 + $0x1f0] sm:$0xff]
    %v428 = vld [vmem:[#allocation8 + $0x1f8] sm:$0xff]
    %v429 = vld [vmem:[%s5] sm:$0x3]
    %v431 = vlaneseq
    %v432 = vshrl.u32 %v431, 7
    %v433 = vsub.s32 0, %v432
    %v434 = vrot.slane %v429, %v433
    %v435 = vlaneseq
    %v436 = vshrl.u32 %v435, 7
    %v437 = vsub.s32 1, %v436
    %v438 = vrot.slane %v429, %v437
    %441 = vmatprep.subr.mxu0 %v396
    %442 = vmatpush1.msra.mxu0 %v395
    %443 = vmatprep.subr.mxu0 %v394
    %444 = vmatpush1.msra.mxu0 %v393
    %445 = vmatprep.subr.mxu0 %v392
    %446 = vmatpush1.msra.mxu0 %v391
    %447 = vmatprep.subr.mxu0 %v390
    %448 = vmatpush1.msra.mxu0 %v389
    %449 = vmatprep.subr.mxu0 %v388
    %450 = vmatpush1.msra.mxu0 %v387
    %451 = vmatprep.subr.mxu0 %v386
    %452 = vmatpush1.msra.mxu0 %v385
    %453 = vmatprep.subr.mxu0 %v384
    %454 = vmatpush1.msra.mxu0 %v383
    %455 = vmatprep.subr.mxu0 %v382
    %456 = vmatpush1.msra.mxu0 %v381
    %457 = vmatprep.subr.mxu0 %v380
    %458 = vmatpush1.msra.mxu0 %v379
    %459 = vmatprep.subr.mxu0 %v378
    %460 = vmatpush1.msra.mxu0 %v377
    %461 = vmatprep.subr.mxu0 %v376
    %462 = vmatpush1.msra.mxu0 %v375
    %463 = vmatprep.subr.mxu0 %v374
    %464 = vmatpush1.msra.mxu0 %v373
    %465 = vmatprep.subr.mxu0 %v372
    %466 = vmatpush1.msra.mxu0 %v371
    %467 = vmatprep.subr.mxu0 %v370
    %468 = vmatpush1.msra.mxu0 %v369
    %469 = vmatprep.subr.mxu0 %v368
    %470 = vmatpush1.msra.mxu0 %v367
    %471 = vmatprep.subr.mxu0 %v366
    %472 = vmatpush1.msra.mxu0 %v365
    %473 = vmatprep.subr.mxu0 %v428
    %474 = vmatpush2.msra.mxu0 %v427
    %475 = vmatprep.subr.mxu0 %v426
    %476 = vmatpush2.msra.mxu0 %v425
    %477 = vmatprep.subr.mxu0 %v424
    %478 = vmatpush2.msra.mxu0 %v423
    %479 = vmatprep.subr.mxu0 %v422
    %480 = vmatpush2.msra.mxu0 %v421
    %481 = vmatprep.subr.mxu0 %v420
    %482 = vmatpush2.msra.mxu0 %v419
    %483 = vmatprep.subr.mxu0 %v418
    %484 = vmatpush2.msra.mxu0 %v417
    %485 = vmatprep.subr.mxu0 %v416
    %486 = vmatpush2.msra.mxu0 %v415
    %487 = vmatprep.subr.mxu0 %v414
    %488 = vmatpush2.msra.mxu0 %v413
    %489 = vmatprep.subr.mxu0 %v412
    %490 = vmatpush2.msra.mxu0 %v411
    %491 = vmatprep.subr.mxu0 %v410
    %492 = vmatpush2.msra.mxu0 %v409
    %493 = vmatprep.subr.mxu0 %v408
    %494 = vmatpush2.msra.mxu0 %v407
    %495 = vmatprep.subr.mxu0 %v406
    %496 = vmatpush2.msra.mxu0 %v405
    %497 = vmatprep.subr.mxu0 %v404
    %498 = vmatpush2.msra.mxu0 %v403
    %499 = vmatprep.subr.mxu0 %v402
    %500 = vmatpush2.msra.mxu0 %v401
    %501 = vmatprep.subr.mxu0 %v400
    %502 = vmatpush2.msra.mxu0 %v399
    %503 = vmatprep.subr.mxu0 %v398
    %504 = vmatpush2.msra.mxu0 %v397
    %505 = vmatprep.mubr.f32.mxu0 %v364
    %506 = vmatmul.mubr.f32.gmra.mxu0 %v363
    %v507 = vpop.f32.mrf.mxu0
    %v508 = vadd.f32 %v434, %v507
    %v509 = vpop.f32.mrf.mxu0
    %v510 = vadd.f32 %v438, %v509
    %511 = vdwg.mxu0
    %v512 = vlaneseq
    %v513 = vand.u32 %v512, 127
    %v514 = vadd.s32 %v513, 128
    %vm515 = vcmp.eq.s32.totalorder %v513, 225
    %vm516 = vcmp.eq.s32.totalorder %v514, 225
    %v517 = vtanh.pop %v508
    %v518 = vtanh.pop %v510
    %v519 = vsel %vm515, %v517, %v508
    %v520 = vsel %vm516, %v518, %v510
    %521 = vst [vmem:[#allocation10] sm:$0xff] %v519
    %522 = vst [vmem:[#allocation10 + $0x8] sm:$0xff] %v520
    // Predicated region
    $region42: #{tpu_custom_call.1} parent=1 // pred_check
      _
    $region43: #{tpu_custom_call.1} parent=1 // pred_check_branch
      %524 = sbr.rel (0) target = $region45
    $region44: #{tpu_custom_call.1} parent=1 // pred_region
      %s526 = ssub.s32 256, 256
      %527 = vsyncadd [#allocation4], %s526
      %s529 = sshll.u32 [#allocation10], 4
      %s530 = int_to_ptr.vmem [resolvable:$true] %s529
      %532 = dma.vmem_to_hbm [thread:$0]  %s530, 256, %s6, [#allocation4]
    $region45: #{tpu_custom_call.1} parent=1 // pred_fallthru
      _
    // Predicated region
    $region46: #{tpu_custom_call.1} parent=1 // pred_check
      _
    $region47: #{tpu_custom_call.1} parent=1 // pred_check_branch
      %534 = sbr.rel (0) target = $region49
    $region48: #{tpu_custom_call.1} parent=1 // pred_region
      %535 = dma.done [#allocation4], 256
    $region49: #{tpu_custom_call.1} parent=1 // pred_fallthru
      _
    %536 = vsyncpa [#allocation3], 1
    %537 = vsyncpa [#allocation6], 1
    %538 = vsyncpa [#allocation9], 1
    %539 = vsyncpa [#allocation4], 1

</llo_original>
